<compile_context>
chip_gen: v5e
topology: v5e:2x2
jax: 0.10.0
libtpu: 0.0.40
codegen_flags: <defaults>
</compile_context>

<pallas_src>
import functools

import jax
import jax.numpy as jnp
import numpy as np
from jax.experimental import pallas as pl
from jax.experimental.pallas import tpu as pltpu


# ----------------------------- Pallas kernels -----------------------------


def _mean_kernel(id_ref, seq_ref, wagg_t_ref, out_ref, *, lambda_a):
    id_emb = id_ref[...].astype(jnp.float32)              # (bm, D)
    seq = seq_ref[...].astype(jnp.float32)                # (bm, L, D)
    wagg_t = wagg_t_ref[...].astype(jnp.float32)          # (D, D), pre-transposed (in, out)

    # TODO(synk): mask recomputed per tile (one XLU reduce); a caller-provided
    #             mask/lengths input would save it but costs an extra wrapper
    #             pass over seq — not worth it while HBM-bound.
    mask = jnp.sum(seq, axis=-1) != 0.0                   # (bm, L)
    denom = jnp.sum(mask.astype(jnp.float32), axis=-1, keepdims=True) + 1e-12
    mean = jnp.sum(seq, axis=1) / denom                   # (bm, D)

    agg = jnp.dot(mean, wagg_t, preferred_element_type=jnp.float32)
    out_ref[...] = (lambda_a * id_emb + (1.0 - lambda_a) * agg).astype(out_ref.dtype)


def _user_attention_kernel(id_ref, seq_ref, watt_t_ref, watt_b_ref, wagg_t_ref,
                           out_ref, *, lambda_a):
    id_emb = id_ref[...].astype(jnp.float32)               # (bm, D)
    seq = seq_ref[...].astype(jnp.float32)                 # (bm, L, D), f32 working copy
    watt_t = watt_t_ref[...].astype(jnp.float32)           # (D, D), pre-transposed
    watt_b = watt_b_ref[...].astype(jnp.float32)           # (1, D)
    wagg_t = wagg_t_ref[...].astype(jnp.float32)           # (D, D), pre-transposed

    bm, L, D = seq.shape

    # key = tanh(seq @ W_att.T + b)   (tanh goes to the EUP slot)
    # TODO(synk): review suggests einsum('bld,de->ble') to drop this reshape
    #             pair; kept as flat 2-D MXU matmuls because 3-D x 2-D
    #             dot_general lowering in Mosaic is unverified.  Since compute
    #             is f32 the merge of (bm, L) is relayout-free whenever
    #             L % 8 == 0 (sublane pack), which holds for typical maxlen.
    key2d = jnp.dot(seq.reshape(bm * L, D), watt_t,
                    preferred_element_type=jnp.float32) + watt_b
    key = jnp.tanh(key2d).reshape(bm, L, D)                 # (bm, L, D)

    # attention logits: bmm(key, id_emb.unsqueeze(-1)).squeeze(-1)
    attention = jnp.sum(key * id_emb[:, None, :], axis=-1)  # (bm, L)

    # masked_softmax exactly as PyTorch: masked positions set to 0 BEFORE exp,
    # no max-subtraction (faithful to the reference semantics; in-kernel math
    # is f32 even for bf16 inputs, so exp is done at f32 range).
    mask = jnp.sum(seq, axis=-1) == 0.0                     # (bm, L)
    x = jnp.where(mask, 0.0, attention)
    e_x = jnp.exp(x)
    att = e_x / (jnp.sum(e_x, axis=1, keepdims=True) + 1e-12)

    # dropout is identity (rate == 0 / eval mode)
    pooled = jnp.sum(att[:, :, None] * seq, axis=1)         # (bm, D)

    agg = jnp.dot(pooled, wagg_t, preferred_element_type=jnp.float32)
    out_ref[...] = (lambda_a * id_emb + (1.0 - lambda_a) * agg).astype(out_ref.dtype)


def _item_similarity_kernel(id_ref, seq_ref, score_ref, wagg_t_ref, out_ref, *,
                            lambda_a):
    id_emb = id_ref[...].astype(jnp.float32)                # (bm, D)
    seq = seq_ref[...].astype(jnp.float32)                  # (bm, L, D)
    score = score_ref[...].astype(jnp.float32)              # (bm, L)
    wagg_t = wagg_t_ref[...].astype(jnp.float32)            # (D, D)

    # stable softmax over the sequence axis (matches F.softmax)
    m = jnp.max(score, axis=-1, keepdims=True)
    e = jnp.exp(score - m)
    w = e / jnp.sum(e, axis=-1, keepdims=True)               # (bm, L)

    pooled = jnp.sum(w[:, :, None] * seq, axis=1)             # (bm, D)

    agg = jnp.dot(pooled, wagg_t, preferred_element_type=jnp.float32)
    out_ref[...] = (lambda_a * id_emb + (1.0 - lambda_a) * agg).astype(out_ref.dtype)


# --------------------------- tiling / sizing helpers ------------------------


def _round_up(x, m):
    return ((x + m - 1) // m) * m


def _divisors(n):
    ds = set()
    i = 1
    while i * i <= n:
        if n % i == 0:
            ds.add(i)
            ds.add(n // i)
        i += 1
    return sorted(ds)


def _tpu_vmem_and_cores():
    """(per-core VMEM bytes, #TensorCores per chip) with a conservative fallback."""
    try:
        cap = int(pltpu.get_tpu_info().vmem_capacity_bytes)
    except Exception:
        cap = 128 << 20                       # v5e/v6e default
    # TODO(synk): additionally gate on pltpu.ChipVersion once the exact field is
    #             confirmed; vmem_capacity_bytes is assumed per-TensorCore.
    if cap <= (80 << 20):                     # v7x-class: 64 MiB VMEM/TC, 2 TCs
        return cap, 2
    return cap, 1                             # v5e/v6e-class: 128 MiB VMEM, 1 TC


def _pick_tiling(B, L, D, aggregator, seq_itemsize):
    """Choose the batch tile bm, padded batch B_pad and the scoped-VMEM limit.

    The budget counts the double-buffered I/O tiles AND the in-kernel f32
    temporaries (f32 upcast of the seq tile, the tanh key tile, weighted-pool
    products) so the chosen bm actually fits on v7x's 64 MiB per-core VMEM.
    """
    cap, num_cores = _tpu_vmem_and_cores()
    budget = (20 << 20) if cap <= (80 << 20) else (26 << 20)

    d_pad = _round_up(D, 128)                 # minor-dim lane padding in VMEM
    l_pad = _round_up(L, 128)                 # score minor-dim lane padding
    n_weights = 2 if aggregator == 'user_attention' else 1
    n_temp = 4 if aggregator == 'user_attention' else 2   # f32 seq copy, key, ...

    # resident weight/bias bytes (worst case: double-buffered, f32)
    fixed = 2 * (n_weights * D * d_pad * 4 + d_pad * 4)

    seq_row_io = L * d_pad * seq_itemsize                 # one seq buffer, per row
    small_io = 3 * d_pad * 4 + l_pad * 4                  # id/out/score, per row
    temp_row = n_temp * L * d_pad * 4                     # in-kernel f32 temporaries
    per_row = 2 * (seq_row_io + small_io) + temp_row      # I/O double-buffered

    seq_budget = max(budget - fixed, 1 << 20)
    bm_cap = max(1, seq_budget // per_row)
    # >= 2 grid steps per TensorCore so DMA of tile i+1 overlaps compute of tile i
    if B // (2 * num_cores) >= 1:
        bm_cap = min(bm_cap, max(1, B // (2 * num_cores)))
    bm_cap = min(bm_cap, B)

    # ---- choose bm / padding (no "bm must divide B" requirement) ----
    if bm_cap >= B:
        bm, b_pad = B, B                                  # single tile == full dim
    else:
        # multiple of 8 keeps the (8,128) rule happy on the 2nd-minor dim of
        # the (bm, D) id/out blocks
        bm = max(8, (bm_cap // 8) * 8)
        bm = min(bm, B)
        if bm == B or B % bm == 0:
            b_pad = B
        else:
            # a divisor of B (multiple of 8) that is not much smaller than bm
            # avoids the padding copy entirely
            div = max((d for d in _divisors(B) if d % 8 == 0 and d <= bm),
                      default=None)
            if div is not None and 2 * div >= bm:
                bm, b_pad = div, B
            else:
                b_pad = _round_up(B, bm)                  # zero-pad wrapper-side

    need = bm * (2 * (seq_row_io + small_io) + temp_row) + fixed + (2 << 20)
    vmem_limit = int(max(min(0.75 * cap, max(2 * need, 32 << 20)), need))
    return bm, b_pad, vmem_limit


def _cost_estimate(aggregator, B, L, D, itemsize):
    weight_bytes = D * D * 4 * (2 if aggregator == 'user_attention' else 1) + D * 4
    bytes_accessed = B * L * D * itemsize + 2 * B * D * itemsize + weight_bytes
    if aggregator == 'mean':
        flops = B * L * D + 2 * B * D * D + 4 * B * D
        trans = 0
    elif aggregator == 'user_attention':
        flops = 2 * B * L * D * D + 6 * B * L * D + 2 * B * D * D + 4 * B * D
        trans = B * L * D + B * L
    else:  # item_similarity
        bytes_accessed += B * L * itemsize
        flops = 3 * B * L * D + 2 * B * D * D + 4 * B * L + 4 * B * D
        trans = B * L
    return pl.CostEstimate(flops=int(flops), transcendentals=int(trans),
                           bytes_accessed=int(bytes_accessed))


# ------------------------------- wrapper ----------------------------------


def behavior_aggregator(id_emb, sequence_emb, score, params, opt, *, bm=None):
    """Pallas implementation of BehaviorAggregator.forward."""
    B, L, D = sequence_emb.shape
    lambda_a = float(opt['lambda_a'])
    aggregator = opt['aggregator']
    itemsize = jnp.dtype(sequence_emb.dtype).itemsize

    auto_bm, b_pad, vmem_limit = _pick_tiling(B, L, D, aggregator, itemsize)
    if bm is None:
        bm = auto_bm
    else:
        b_pad = B if B % bm == 0 else _round_up(B, bm)

    if aggregator == 'item_similarity' and score.ndim != 2:
        score = score.reshape(score.shape[0], -1)   # glue reshape (plain JAX)

    # Awkward batch sizes: keep the budget-derived tile and zero-pad the batch
    # instead of collapsing bm toward 1.  Padded rows compute harmless finite
    # values (all-zero seq / id / score) and are sliced off below.
    if b_pad != B:
        pad = b_pad - B
        id_emb = jnp.pad(id_emb, ((0, pad), (0, 0)))
        sequence_emb = jnp.pad(sequence_emb, ((0, pad), (0, 0), (0, 0)))
        if aggregator == 'item_similarity':
            score = jnp.pad(score, ((0, pad), (0, 0)))

    grid = (b_pad // bm,)
    id_spec = pl.BlockSpec((bm, D), lambda i: (i, 0))
    seq_spec = pl.BlockSpec((bm, L, D), lambda i: (i, 0, 0))
    score_spec = pl.BlockSpec((bm, L), lambda i: (i, 0))
    # Constant-index blocks are fetched once; single-buffer them when the
    # weights are large enough for the saved VMEM to matter (buys a larger bm).
    # The small-D path keeps defaults so it never depends on pipeline_mode.
    if D >= 256:
        w_spec = pl.BlockSpec((D, D), lambda i: (0, 0), pipeline_mode=pl.Buffered(1))
        b_spec = pl.BlockSpec((1, D), lambda i: (0, 0), pipeline_mode=pl.Buffered(1))
    else:
        w_spec = pl.BlockSpec((D, D), lambda i: (0, 0))
        b_spec = pl.BlockSpec((1, D), lambda i: (0, 0))
    out_spec = pl.BlockSpec((bm, D), lambda i: (i, 0))
    out_shape = jax.ShapeDtypeStruct((b_pad, D), id_emb.dtype)
    cparams = pltpu.CompilerParams(dimension_semantics=("parallel",),
                                   vmem_limit_bytes=int(vmem_limit))
    cost = _cost_estimate(aggregator, b_pad, L, D, itemsize)

    # One-time wrapper-side transposes: (out, in) -> (in, out) so the kernels
    # never redo the DxD transpose on the XLU every grid step.
    wagg_t = jnp.transpose(params['W_agg_w'])

    if aggregator == 'mean':
        kernel = functools.partial(_mean_kernel, lambda_a=lambda_a)
        out = pl.pallas_call(
            kernel,
            out_shape=out_shape,
            grid_spec=pltpu.PrefetchScalarGridSpec(
                num_scalar_prefetch=0, grid=grid,
                in_specs=[id_spec, seq_spec, w_spec],
                out_specs=out_spec),
            compiler_params=cparams,
            cost_estimate=cost,
        )(id_emb, sequence_emb, wagg_t)

    elif aggregator == 'user_attention':
        watt_t = jnp.transpose(params['W_att_w'])
        kernel = functools.partial(_user_attention_kernel, lambda_a=lambda_a)
        out = pl.pallas_call(
            kernel,
            out_shape=out_shape,
            grid_spec=pltpu.PrefetchScalarGridSpec(
                num_scalar_prefetch=0, grid=grid,
                in_specs=[id_spec, seq_spec, w_spec, b_spec, w_spec],
                out_specs=out_spec),
            compiler_params=cparams,
            cost_estimate=cost,
        )(id_emb, sequence_emb, watt_t, params['W_att_b'], wagg_t)

    elif aggregator == 'item_similarity':
        kernel = functools.partial(_item_similarity_kernel, lambda_a=lambda_a)
        out = pl.pallas_call(
            kernel,
            out_shape=out_shape,
            grid_spec=pltpu.PrefetchScalarGridSpec(
                num_scalar_prefetch=0, grid=grid,
                in_specs=[id_spec, seq_spec, score_spec, w_spec],
                out_specs=out_spec),
            compiler_params=cparams,
            cost_estimate=cost,
        )(id_emb, sequence_emb, score, wagg_t)

    else:
        # TODO(synk): 'Transformer' aggregator not implemented (TransformerEncoder
        #             is not defined in the provided module).
        raise NotImplementedError(f"aggregator {aggregator!r} not supported")

    return out[:B] if b_pad != B else out


# --------------------------- pure-JAX reference ----------------------------


def reference(id_emb, seq, score, params, opt):
    id_emb = id_emb.astype(jnp.float32)
    seq = seq.astype(jnp.float32)
    score = score.astype(jnp.float32)
    lam = opt['lambda_a']
    wagg = params['W_agg_w']
    if opt['aggregator'] == 'mean':
        mask = (seq.sum(-1) != 0).astype(jnp.float32)
        mean = seq.sum(1) / (mask.sum(-1, keepdims=True) + 1e-12)
        out = mean @ wagg.T
    elif opt['aggregator'] == 'user_attention':
        key = jnp.tanh(seq @ params['W_att_w'].T + params['W_att_b'][0])
        mask = seq.sum(-1) == 0
        att = jnp.einsum('bld,bd->bl', key, id_emb)
        att = jnp.where(mask, 0.0, att)
        e = jnp.exp(att)
        att = e / (e.sum(1, keepdims=True) + 1e-12)
        out = jnp.einsum('bl,bld->bd', att, seq) @ wagg.T
    elif opt['aggregator'] == 'item_similarity':
        if score.ndim != 2:
            score = score.reshape(score.shape[0], -1)
        w = jax.nn.softmax(score, axis=-1)
        out = (w[:, :, None] * seq).sum(1) @ wagg.T
    else:
        raise NotImplementedError
    return lam * id_emb + (1 - lam) * out


# --------------------------------- main ------------------------------------


if __name__ == "__main__":
    B, L, D = 16, 8, 32
    opt = {'aggregator': 'user_attention', 'lambda_a': 0.7,
           'latent_dim': D, 'dropout': 0.0, 'maxlen': L}

    key = jax.random.PRNGKey(0)
    k1, k2, k3, k4, k5, k6 = jax.random.split(key, 6)

    id_emb = jax.random.normal(k1, (B, D), jnp.float32)
    seq_emb = jax.random.normal(k2, (B, L, D), jnp.float32)
    # create padded (all-zero) tail positions so the mask paths are exercised
    lengths = (jnp.arange(B) % L) + 1                       # valid lengths 1..L
    valid = (jnp.arange(L)[None, :] < lengths[:, None])     # (B, L)
    seq_emb = seq_emb * valid[:, :, None].astype(jnp.float32)
    score = jax.random.normal(k3, (B, L), jnp.float32)

    # deterministic parameter init (PyTorch Linear-like uniform(-1/sqrt(D), 1/sqrt(D)))
    bound = 1.0 / np.sqrt(D)
    params = {
        'W_agg_w': jax.random.uniform(k4, (D, D), jnp.float32, -bound, bound),
        'W_att_w': jax.random.uniform(k5, (D, D), jnp.float32, -bound, bound),
        'W_att_b': jax.random.uniform(k6, (1, D), jnp.float32, -bound, bound),
    }

    # f32 I/O: tight check (auto bm=8 here -> 2 pipelined grid steps)
    for mode in ['mean', 'user_attention', 'item_similarity']:
        opt_m = dict(opt, aggregator=mode)
        out = jax.block_until_ready(
            behavior_aggregator(id_emb, seq_emb, score, params, opt_m))
        ref = jax.block_until_ready(reference(id_emb, seq_emb, score, params, opt_m))
        np.testing.assert_allclose(np.asarray(out), np.asarray(ref),
                                   rtol=2e-4, atol=2e-4)

    # awkward batch size (B=10): exercises the wrapper-side zero-pad path
    # (bm stays at the budget-derived 8; B padded to 16, output sliced to 10)
    for mode in ['mean', 'user_attention']:
        opt_m = dict(opt, aggregator=mode)
        out = jax.block_until_ready(
            behavior_aggregator(id_emb[:10], seq_emb[:10], score[:10], params, opt_m))
        assert out.shape == (10, D)
        ref = jax.block_until_ready(
            reference(id_emb[:10], seq_emb[:10], score[:10], params, opt_m))
        np.testing.assert_allclose(np.asarray(out), np.asarray(ref),
                                   rtol=2e-4, atol=2e-4)

    # bf16 I/O (halves HBM traffic on the mem-bound seq input): loose check
    id_bf = id_emb.astype(jnp.bfloat16)
    seq_bf = seq_emb.astype(jnp.bfloat16)
    score_bf = score.astype(jnp.bfloat16)
    for mode in ['mean', 'user_attention', 'item_similarity']:
        opt_m = dict(opt, aggregator=mode)
        out = jax.block_until_ready(
            behavior_aggregator(id_bf, seq_bf, score_bf, params, opt_m))
        ref = jax.block_until_ready(
            reference(id_bf, seq_bf, score_bf, params, opt_m))
        np.testing.assert_allclose(np.asarray(out, dtype=np.float32),
                                   np.asarray(ref), rtol=3e-2, atol=3e-2)

    print("KERNEL_OK")
</pallas_src>

<mosaic_0001>
module attributes {stable_mosaic.version = 11 : i64} {
  func.func @_mean_kernel(%arg0: i32, %arg1: memref<8x32xf32, #tpu.memory_space<vmem>>, %arg2: memref<8x8x32xf32, #tpu.memory_space<vmem>>, %arg3: memref<32x32xf32, #tpu.memory_space<vmem>>, %arg4: memref<8x32xf32, #tpu.memory_space<vmem>>) attributes {dimension_semantics = [#tpu.dimension_semantics<parallel>], iteration_bounds = array<i64: 2>, scalar_prefetch = 0 : i64, scratch_operands = 0 : i64, tpu.core_type = #tpu.core_type<tc>, window_params = [{transform_indices = @transform_0, window_bounds = array<i64: 8, 32>}, {transform_indices = @transform_1, window_bounds = array<i64: 8, 8, 32>}, {pipeline_mode = #tpu.pipeline_mode<synchronous>, transform_indices = @transform_2, window_bounds = array<i64: 32, 32>}, {transform_indices = @transform_3, window_bounds = array<i64: 8, 32>}]} {
    %c0 = arith.constant 0 : index
    %c0_0 = arith.constant 0 : index
    %0 = vector.load %arg1[%c0, %c0_0] : memref<8x32xf32, #tpu.memory_space<vmem>>, vector<8x32xf32>
    %c0_1 = arith.constant 0 : index
    %c0_2 = arith.constant 0 : index
    %c0_3 = arith.constant 0 : index
    %1 = vector.load %arg2[%c0_1, %c0_2, %c0_3] : memref<8x8x32xf32, #tpu.memory_space<vmem>>, vector<8x8x32xf32>
    %c0_4 = arith.constant 0 : index
    %c0_5 = arith.constant 0 : index
    %2 = vector.load %arg3[%c0_4, %c0_5] : memref<32x32xf32, #tpu.memory_space<vmem>>, vector<32x32xf32>
    %cst = arith.constant dense<0.000000e+00> : vector<8x8xf32>
    %3 = vector.multi_reduction <add>, %1, %cst [2] : vector<8x8x32xf32> to vector<8x8xf32>
    %cst_6 = arith.constant 0.000000e+00 : f32
    %4 = vector.broadcast %cst_6 : f32 to vector<8x8xf32>
    %5 = arith.cmpf one, %3, %4 : vector<8x8xf32>
    %6 = arith.extui %5 : vector<8x8xi1> to vector<8x8xi32>
    %7 = arith.sitofp %6 : vector<8x8xi32> to vector<8x8xf32>
    %cst_7 = arith.constant dense<0.000000e+00> : vector<8xf32>
    %8 = vector.multi_reduction <add>, %7, %cst_7 [1] : vector<8x8xf32> to vector<8xf32>
    %9 = vector.shape_cast %8 : vector<8xf32> to vector<8x1xf32>
    %cst_8 = arith.constant 9.99999996E-13 : f32
    %10 = vector.broadcast %cst_8 : f32 to vector<8x1xf32>
    %11 = arith.addf %9, %10 : vector<8x1xf32>
    %cst_9 = arith.constant dense<0.000000e+00> : vector<8x32xf32>
    %12 = vector.multi_reduction <add>, %1, %cst_9 [1] : vector<8x8x32xf32> to vector<8x32xf32>
    %13 = vector.broadcast %11 : vector<8x1xf32> to vector<8x32xf32>
    %14 = arith.divf %12, %13 : vector<8x32xf32>
    %cst_10 = arith.constant dense<0.000000e+00> : vector<8x32xf32>
    %15 = tpu.matmul %14, %2, %cst_10 {dimension_numbers = #tpu.dot_dimension_numbers<[1], [0], [0], [1], [0, 0, 1, 1], [], []>} : vector<8x32xf32>, vector<32x32xf32>, vector<8x32xf32> -> vector<8x32xf32>
    %cst_11 = arith.constant 0.699999988 : f32
    %16 = vector.broadcast %cst_11 : f32 to vector<8x32xf32>
    %17 = arith.mulf %16, %0 : vector<8x32xf32>
    %cst_12 = arith.constant 3.000000e-01 : f32
    %18 = vector.broadcast %cst_12 : f32 to vector<8x32xf32>
    %19 = arith.mulf %18, %15 : vector<8x32xf32>
    %20 = arith.addf %17, %19 : vector<8x32xf32>
    %c0_13 = arith.constant 0 : index
    %c0_14 = arith.constant 0 : index
    %21 = vector.load %arg4[%c0_13, %c0_14] : memref<8x32xf32, #tpu.memory_space<vmem>>, vector<8x32xf32>
    tpu.vector_store %arg4[%c0_13, %c0_14], %20 {strides = array<i32>} : memref<8x32xf32, #tpu.memory_space<vmem>>, vector<8x32xf32>,
    return
  }
  func.func @transform_0(%arg0: i32) -> (i32, i32) {
    %c0_i32 = arith.constant 0 : i32
    %c0_i32_0 = arith.constant 0 : i32
    return %arg0, %c0_i32 : i32, i32
  }
  func.func @transform_1(%arg0: i32) -> (i32, i32, i32) {
    %c0_i32 = arith.constant 0 : i32
    %c0_i32_0 = arith.constant 0 : i32
    %c0_i32_1 = arith.constant 0 : i32
    return %arg0, %c0_i32, %c0_i32_0 : i32, i32, i32
  }
  func.func @transform_2(%arg0: i32) -> (i32, i32) {
    %c0_i32 = arith.constant 0 : i32
    %c0_i32_0 = arith.constant 0 : i32
    %c0_i32_1 = arith.constant 0 : i32
    return %c0_i32, %c0_i32_0 : i32, i32
  }
  func.func @transform_3(%arg0: i32) -> (i32, i32) {
    %c0_i32 = arith.constant 0 : i32
    %c0_i32_0 = arith.constant 0 : i32
    return %arg0, %c0_i32 : i32, i32
  }
}

</mosaic_0001>

<llo_original>
// kernel: tpu_custom_call.1
$region0: #{tpu_custom_call.1}
  #allocation0 [shape = 'u32[]', space=smem, size = 0x4, offset = 0x4, fixed_abs, tag = 'smem constant byte address 0x4 - core index']
  #allocation1 [shape = 'u32[72,128]{1,0:T(1,128)}', space=vmem, size = 0x9000, scoped, tag = 'internal scratch']
  %s0 = inlined_call_operand.hbm [shape: f32[16,32], index: 0, kind: input, shape index: {}]
  %s1 = inlined_call_operand.hbm [shape: f32[16,8,32], index: 1, kind: input, shape index: {}]
  %s2 = inlined_call_operand.hbm [shape: f32[32,32], index: 2, kind: input, shape index: {}]
  %s3 = inlined_call_operand.hbm [shape: f32[16,32], index: 3, kind: output, shape index: {}]
  %s4 = sld [smem:[#allocation0]]
  $region57: #{tpu_custom_call.1} parent=0
    _
  %s6 = ssub.s32 1, %s4
  %s7 = scalar_select 0, %s6, %s4
  $region1: #{tpu_custom_call.1} parent=0
    #allocation2 [shape = 'u8[8192]{0}', space=vmem, size = 0x2000, scoped, tag = 'input window, operand 0']
    #allocation3 [shape = 's32[2]{0}', space=sflag, size = 0x8, scoped, tag = 'scoped memory for tpu_custom_call.1']
    #allocation4 [shape = 's32[2]{0}', space=sflag, size = 0x8, scoped, tag = 'scoped memory for tpu_custom_call.1']
    #allocation5 [shape = 'u8[65536]{0}', space=vmem, size = 0x10000, scoped, tag = 'input window, operand 1']
    #allocation6 [shape = 's32[2]{0}', space=sflag, size = 0x8, scoped, tag = 'scoped memory for tpu_custom_call.1']
    #allocation7 [shape = 'u8[16384]{0}', space=vmem, size = 0x4000, scoped, tag = 'input window, operand 2, single buffered']
    #allocation8 [shape = 'u8[8192]{0}', space=vmem, size = 0x2000, scoped, tag = 'output window, operand 0']
    %8 = vsyncpa [#allocation3], 0
    %s9 = scalar_lea.sflag [#allocation3], 1
    %10 = vsyncpa %s9, 0
    %11 = vsyncpa [#allocation6], 0
    %s12 = scalar_lea.sflag [#allocation6], 1
    %13 = vsyncpa %s12, 0
    %14 = vsyncpa [#allocation4], 0
    %s15 = scalar_lea.sflag [#allocation4], 1
    %16 = vsyncpa %s15, 0
    loop: start=0, step=1, limit=4
    $region2: #{tpu_custom_call.1} parent=1 // loop_pre_header
      _
    $region3: #{tpu_custom_call.1} parent=1 // loop_header
      %s18 = sphi 0, %s22
      %p19 = scmp.ge.s32.totalorder %s18, 4
      %s28 = sphi 0, %s30
      %s31 = sphi 0, %s28
      %s32 = sphi 0, %s31
      %s48 = sphi 0, %s32
      %s54 = sphi 0, %s56
      %s57 = sphi 0, %s54
      %s58 = sphi 0, %s57
      %s74 = sphi 0, %s58
      %s78 = sphi 0, %s78
      %s80 = sphi 0, %s78
      %s81 = sphi 0, %s80
      %s95 = sphi 0, %s81
      %s101 = sphi 0, %s103
      %s104 = sphi 0, %s101
      %s105 = sphi 0, %s104
      %s121 = sphi 0, %s105
    $region4: #{tpu_custom_call.1} parent=1 // loop_header_branch
      %21 = sbr.rel (%p19) target = $region8
    $region5: #{tpu_custom_call.1} parent=1 // loop_body
      %s23 = ssub.s32 %s18, 1
      %s24 = ssub.s32 %s18, 2
      %s25 = sadd.s32 %s18, 1
      %s26 = ssub.s32 %s18, %s25
      %p27 = scmp.eq.s32.totalorder %s26, 0
      %s29 = sadd.s32 %s28, 1
      %s30 = scalar_select %p27, %s28, %s29
      %p33 = pneg %p27
      %p34 = scmp.eq.s32.totalorder %s18, 1
      %p35 = por %p33, %p34
      %p36 = scmp.ne.s32.totalorder %s28, %s31
      %p37 = scmp.eq.s32.totalorder %s18, 0
      %p38 = por %p36, %p37
      %p39 = scmp.ne.s32.totalorder %s28, %s31
      %p40 = scmp.eq.s32.totalorder %s23, 1
      %p41 = por %p39, %p40
      %p42 = scmp.ne.s32.totalorder %s31, %s32
      %p43 = scmp.eq.s32.totalorder %s23, 0
      %p44 = por %p42, %p43
      %p45 = scmp.ne.s32.totalorder %s31, %s32
      %p46 = scmp.eq.s32.totalorder %s24, 1
      %p47 = por %p45, %p46
      %p49 = scmp.ne.s32.totalorder %s32, %s48
      %p50 = scmp.eq.s32.totalorder %s24, 0
      %p51 = por %p49, %p50
      %s52 = ssub.s32 %s18, %s25
      %p53 = scmp.eq.s32.totalorder %s52, 0
      %s55 = sadd.s32 %s54, 1
      %s56 = scalar_select %p53, %s54, %s55
      %p59 = pneg %p53
      %p60 = scmp.eq.s32.totalorder %s18, 1
      %p61 = por %p59, %p60
      %p62 = scmp.ne.s32.totalorder %s54, %s57
      %p63 = scmp.eq.s32.totalorder %s18, 0
      %p64 = por %p62, %p63
      %p65 = scmp.ne.s32.totalorder %s54, %s57
      %p66 = scmp.eq.s32.totalorder %s23, 1
      %p67 = por %p65, %p66
      %p68 = scmp.ne.s32.totalorder %s57, %s58
      %p69 = scmp.eq.s32.totalorder %s23, 0
      %p70 = por %p68, %p69
      %p71 = scmp.ne.s32.totalorder %s57, %s58
      %p72 = scmp.eq.s32.totalorder %s24, 1
      %p73 = por %p71, %p72
      %p75 = scmp.ne.s32.totalorder %s58, %s74
      %p76 = scmp.eq.s32.totalorder %s24, 0
      %p77 = por %p75, %p76
      %s79 = sadd.s32 %s78, 1
      %p82 = scmp.eq.s32.totalorder %s18, 1
      %p83 = scmp.ne.s32.totalorder %s78, %s80
      %p84 = scmp.eq.s32.totalorder %s18, 0
      %p85 = por %p83, %p84
      %p86 = scmp.ne.s32.totalorder %s78, %s80
      %p87 = scmp.eq.s32.totalorder %s23, 1
      %p88 = por %p86, %p87
      %p89 = scmp.ne.s32.totalorder %s80, %s81
      %p90 = scmp.eq.s32.totalorder %s23, 0
      %p91 = por %p89, %p90
      %p92 = scmp.ne.s32.totalorder %s80, %s81
      %p93 = scmp.eq.s32.totalorder %s24, 1
      %p94 = por %p92, %p93
      %p96 = scmp.ne.s32.totalorder %s81, %s95
      %p97 = scmp.eq.s32.totalorder %s24, 0
      %p98 = por %p96, %p97
      %s99 = ssub.s32 %s18, %s25
      %p100 = scmp.eq.s32.totalorder %s99, 0
      %s102 = sadd.s32 %s101, 1
      %s103 = scalar_select %p100, %s101, %s102
      %p106 = pneg %p100
      %p107 = scmp.eq.s32.totalorder %s18, 1
      %p108 = por %p106, %p107
      %p109 = scmp.ne.s32.totalorder %s101, %s104
      %p110 = scmp.eq.s32.totalorder %s18, 0
      %p111 = por %p109, %p110
      %p112 = scmp.ne.s32.totalorder %s101, %s104
      %p113 = scmp.eq.s32.totalorder %s23, 1
      %p114 = por %p112, %p113
      %p115 = scmp.ne.s32.totalorder %s104, %s105
      %p116 = scmp.eq.s32.totalorder %s23, 0
      %p117 = por %p115, %p116
      %p118 = scmp.ne.s32.totalorder %s104, %s105
      %p119 = scmp.eq.s32.totalorder %s24, 1
      %p120 = por %p118, %p119
      %p122 = scmp.ne.s32.totalorder %s105, %s121
      %p123 = scmp.eq.s32.totalorder %s24, 0
      %p124 = por %p122, %p123
      %p125 = scmp.le.s32.totalorder 1, %s18
      %p126 = scmp.lt.s32.totalorder %s18, 3
      %p127 = pnand %p125, %p126
      %p128 = pneg %p127
      // Predicated region
      $region9: #{tpu_custom_call.1} parent=5 // pred_check
        _
      $region10: #{tpu_custom_call.1} parent=5 // pred_check_branch
        %130 = sbr.rel (%p127) target = $region12
      $region11: #{tpu_custom_call.1} parent=5 // pred_region
        %s131 = ssub.s32 %s18, 1
        // Predicated region
        $region13: #{tpu_custom_call.1} parent=11 // pred_check
          %p132 = pneg %p91
        $region14: #{tpu_custom_call.1} parent=11 // pred_check_branch
          %134 = sbr.rel (%p132) target = $region16
        $region15: #{tpu_custom_call.1} parent=11 // pred_region
          %136 = vsyncadd [#allocation6], 0
          %s137 = sshll.u32 %s2, 4
          %s138 = int_to_ptr.hbm [resolvable:$true] %s137
          %s139 = sshll.u32 [#allocation7], 4
          %s140 = int_to_ptr.vmem [resolvable:$true] %s139
          %145 = dma.hbm_to_vmem [thread:$0]  %s138, 512, %s140, [#allocation6], 128, 128, 8
        $region16: #{tpu_custom_call.1} parent=11 // pred_fallthru
          _
      $region12: #{tpu_custom_call.1} parent=5 // pred_fallthru
        _
      %p146 = scmp.lt.s32.totalorder %s18, 2
      // Predicated region
      $region17: #{tpu_custom_call.1} parent=5 // pred_check
        %p147 = pneg %p146
      $region18: #{tpu_custom_call.1} parent=5 // pred_check_branch
        %149 = sbr.rel (%p147) target = $region20
      $region19: #{tpu_custom_call.1} parent=5 // pred_region
        // Predicated region
        $region21: #{tpu_custom_call.1} parent=19 // pred_check
          %p150 = pneg %p38
        $region22: #{tpu_custom_call.1} parent=19 // pred_check_branch
          %152 = sbr.rel (%p150) target = $region24
        $region23: #{tpu_custom_call.1} parent=19 // pred_region
          %s153 = sand.u32 %s28, 1
          %s154 = scalar_lea.sflag [#allocation3], %s153
          %s155 = sand.u32 %s28, 1
          %s156 = smul.addr %s155, 8
          %s157 = scalar_lea.vmem [#allocation2], %s156
          %159 = vsyncadd %s154, 0
          %s160 = smul.addr %s18, 8
          %s161 = scalar_lea.hbm %s0, %s160
          %s163 = sshll.u32 %s161, 4
          %s164 = int_to_ptr.hbm [resolvable:$true] %s163
          %s165 = sshll.u32 %s157, 4
          %s166 = int_to_ptr.vmem [resolvable:$true] %s165
          %168 = dma.hbm_to_vmem [thread:$0]  %s164, 128, %s166, %s154
        $region24: #{tpu_custom_call.1} parent=19 // pred_fallthru
          _
        // Predicated region
        $region25: #{tpu_custom_call.1} parent=19 // pred_check
          %p169 = pneg %p64
        $region26: #{tpu_custom_call.1} parent=19 // pred_check_branch
          %171 = sbr.rel (%p169) target = $region28
        $region27: #{tpu_custom_call.1} parent=19 // pred_region
          %s172 = sand.u32 %s18, 1
          %s173 = scalar_lea.sflag [#allocation6], %s172
          %s174 = sand.u32 %s54, 1
          %s175 = smul.addr %s174, 64
          %s176 = scalar_lea.vmem [#allocation5], %s175
          %s177 = smul.u32 8, %s18
          %179 = vsyncadd %s173, 0
          %s180 = smul.addr %s177, 8
          %s181 = scalar_lea.hbm %s1, %s180
          %s182 = sshll.u32 %s181, 4
          %s183 = int_to_ptr.hbm [resolvable:$true] %s182
          %s184 = sshll.u32 %s176, 4
          %s185 = int_to_ptr.vmem [resolvable:$true] %s184
          %190 = dma.hbm_to_vmem [thread:$0]  %s183, 1024, %s185, %s173, 128, 128, 8
        $region28: #{tpu_custom_call.1} parent=19 // pred_fallthru
          _
      $region20: #{tpu_custom_call.1} parent=5 // pred_fallthru
        _
      %p191 = scmp.le.s32.totalorder 1, %s18
      %p192 = scmp.lt.s32.totalorder %s18, 3
      %p193 = pnand %p191, %p192
      %p194 = pneg %p193
      // Predicated region
      $region29: #{tpu_custom_call.1} parent=5 // pred_check
        _
      $region30: #{tpu_custom_call.1} parent=5 // pred_check_branch
        %196 = sbr.rel (%p193) target = $region32
      $region31: #{tpu_custom_call.1} parent=5 // pred_region
        %s197 = ssub.s32 %s18, 1
        %s198 = sand.u32 %s31, 1
        %s199 = scalar_lea.sflag [#allocation3], %s198
        %s200 = sand.u32 %s31, 1
        %s201 = smul.addr %s200, 8
        %s202 = scalar_lea.vmem [#allocation2], %s201
        // Predicated region
        $region33: #{tpu_custom_call.1} parent=31 // pred_check
          %p203 = pneg %p44
        $region34: #{tpu_custom_call.1} parent=31 // pred_check_branch
          %205 = sbr.rel (%p203) target = $region36
        $region35: #{tpu_custom_call.1} parent=31 // pred_region
          %207 = dma.done %s199, 128
        $region36: #{tpu_custom_call.1} parent=31 // pred_fallthru
          _
        %s208 = sand.u32 %s23, 1
        %s209 = scalar_lea.sflag [#allocation6], %s208
        %s210 = sand.u32 %s57, 1
        %s211 = smul.addr %s210, 64
        %s212 = scalar_lea.vmem [#allocation5], %s211
        // Predicated region
        $region37: #{tpu_custom_call.1} parent=31 // pred_check
          %p213 = pneg %p70
        $region38: #{tpu_custom_call.1} parent=31 // pred_check_branch
          %215 = sbr.rel (%p213) target = $region40
        $region39: #{tpu_custom_call.1} parent=31 // pred_region
          %217 = dma.done %s209, 1024
        $region40: #{tpu_custom_call.1} parent=31 // pred_fallthru
          _
        // Predicated region
        $region41: #{tpu_custom_call.1} parent=31 // pred_check
          %p218 = pneg %p91
        $region42: #{tpu_custom_call.1} parent=31 // pred_check_branch
          %220 = sbr.rel (%p218) target = $region44
        $region43: #{tpu_custom_call.1} parent=31 // pred_region
          %222 = dma.done [#allocation6], 512
        $region44: #{tpu_custom_call.1} parent=31 // pred_fallthru
          _
        %s223 = sand.u32 %s31, 1
        %s224 = scalar_lea.sflag [#allocation3], %s223
        %s225 = sand.u32 %s31, 1
        %s226 = smul.addr %s225, 8
        %s227 = scalar_lea.vmem [#allocation2], %s226
        %p228 = pneg %p44
        %p229 = pneg %p41
        %s230 = sand.u32 %s23, 1
        %s231 = scalar_lea.sflag [#allocation6], %s230
        %s232 = sand.u32 %s57, 1
        %s233 = smul.addr %s232, 64
        %s234 = scalar_lea.vmem [#allocation5], %s233
        %p235 = pneg %p70
        %p236 = pneg %p67
        %p237 = pneg %p91
        %p238 = pneg %p88
        %p239 = pneg %p117
        %p240 = pneg %p114
        %s241 = sand.u32 %s104, 1
        %s242 = scalar_lea.sflag [#allocation4], %s241
        %s243 = sand.u32 %s104, 1
        %s244 = smul.addr %s243, 8
        %s245 = scalar_lea.vmem [#allocation8], %s244
        %s246 = smul.u32 8, %s23
        %v247 = vld [vmem:[%s202] sm:$0xff]
        %v248 = vld [vmem:[%s212] sm:$0xff]
        %v249 = vld [vmem:[%s212 + $0x8] sm:$0xff]
        %v250 = vld [vmem:[%s212 + $0x10] sm:$0xff]
        %v251 = vld [vmem:[%s212 + $0x18] sm:$0xff]
        %v252 = vld [vmem:[%s212 + $0x20] sm:$0xff]
        %v253 = vld [vmem:[%s212 + $0x28] sm:$0xff]
        %v254 = vld [vmem:[%s212 + $0x30] sm:$0xff]
        %v255 = vld [vmem:[%s212 + $0x38] sm:$0xff]
        %v256 = vld [vmem:[#allocation7] sm:$0xff]
        %v257 = vld [vmem:[#allocation7 + $0x8] sm:$0xff]
        %v258 = vld [vmem:[#allocation7 + $0x10] sm:$0xff]
        %v259 = vld [vmem:[#allocation7 + $0x18] sm:$0xff]
        %vm260 = vcmask 261120
        %v261 = vsel %vm260, %v248, 0.0
        %262 = vadd.xlane.f32.xlu0 %v261
        %v263 = vpop.xlane.xlu0 %262
        %v264 = vsel %vm260, %v249, 0.0
        %265 = vadd.xlane.f32.xlu0 %v264
        %v266 = vpop.xlane.xlu0 %265
        %v267 = vsel %vm260, %v250, 0.0
        %268 = vadd.xlane.f32.xlu0 %v267
        %v269 = vpop.xlane.xlu0 %268
        %v270 = vsel %vm260, %v251, 0.0
        %271 = vadd.xlane.f32.xlu0 %v270
        %v272 = vpop.xlane.xlu0 %271
        %v273 = vsel %vm260, %v252, 0.0
        %274 = vadd.xlane.f32.xlu0 %v273
        %v275 = vpop.xlane.xlu0 %274
        %v276 = vsel %vm260, %v253, 0.0
        %277 = vadd.xlane.f32.xlu0 %v276
        %v278 = vpop.xlane.xlu0 %277
        %v279 = vsel %vm260, %v254, 0.0
        %280 = vadd.xlane.f32.xlu0 %v279
        %v281 = vpop.xlane.xlu0 %280
        %v282 = vsel %vm260, %v255, 0.0
        %283 = vadd.xlane.f32.xlu0 %v282
        %v284 = vpop.xlane.xlu0 %283
        %vm285 = vcmp.ne.f32.partialorder %v263, 0.0
        %vm286 = vcmp.ne.f32.partialorder %v266, 0.0
        %vm287 = vcmp.ne.f32.partialorder %v269, 0.0
        %vm288 = vcmp.ne.f32.partialorder %v272, 0.0
        %vm289 = vcmp.ne.f32.partialorder %v275, 0.0
        %vm290 = vcmp.ne.f32.partialorder %v278, 0.0
        %vm291 = vcmp.ne.f32.partialorder %v281, 0.0
        %vm292 = vcmp.ne.f32.partialorder %v284, 0.0
        %v293 = vsel %vm285, 1, 0
        %v294 = vsel %vm286, 1, 0
        %v295 = vsel %vm287, 1, 0
        %v296 = vsel %vm288, 1, 0
        %v297 = vsel %vm289, 1, 0
        %v298 = vsel %vm290, 1, 0
        %v299 = vsel %vm291, 1, 0
        %v300 = vsel %vm292, 1, 0
        %v301 = vcvt.s32.f32 %v293
        %v302 = vcvt.s32.f32 %v294
        %v303 = vcvt.s32.f32 %v295
        %v304 = vcvt.s32.f32 %v296
        %v305 = vcvt.s32.f32 %v297
        %v306 = vcvt.s32.f32 %v298
        %v307 = vcvt.s32.f32 %v299
        %v308 = vcvt.s32.f32 %v300
        %v317 = vlaneseq
        %v318 = vand.u32 %v317, 127
        %v319 = vperm.slane %v301, %v318
        %v320 = vperm.slane %v302, %v318
        %v321 = vperm.slane %v303, %v318
        %v322 = vperm.slane %v304, %v318
        %v323 = vperm.slane %v305, %v318
        %v324 = vperm.slane %v306, %v318
        %v325 = vperm.slane %v307, %v318
        %v326 = vperm.slane %v308, %v318
        %vm327 = vcmask 1041409
        %v328 = vsel %vm327, %v320, %v319
        %vm329 = vcmask 1042434
        %v330 = vsel %vm329, %v321, %v328
        %vm331 = vcmask 1043459
        %v332 = vsel %vm331, %v322, %v330
        %vm333 = vcmask 1044484
        %v334 = vsel %vm333, %v323, %v332
        %vm335 = vcmask 1045509
        %v336 = vsel %vm335, %v324, %v334
        %vm337 = vcmask 1046534
        %v338 = vsel %vm337, %v325, %v336
        %vm339 = vcmask 1047559
        %v340 = vsel %vm339, %v326, %v338
        %vm342 = vcmask 64512
        %v343 = vsel %vm342, %v340, 0.0
        %344 = vadd.xlane.f32.xlu0 %v343
        %v345 = vpop.xlane.xlu0 %344
        %v346 = vadd.f32 %v345, 1e-12
        %v347 = vrot.slane %v261, 4
        %v348 = vadd.f32 %v261, %v347
        %v349 = vrot.slane %v348, 2
        %v350 = vadd.f32 %v348, %v349
        %v351 = vrot.slane %v350, 1
        %v352 = vadd.f32 %v350, %v351
        %v353 = vrot.slane %v264, 4
        %v354 = vadd.f32 %v264, %v353
        %v355 = vrot.slane %v354, 2
        %v356 = vadd.f32 %v354, %v355
        %v357 = vrot.slane %v356, 1
        %v358 = vadd.f32 %v356, %v357
        %v359 = vrot.slane %v267, 4
        %v360 = vadd.f32 %v267, %v359
        %v361 = vrot.slane %v360, 2
        %v362 = vadd.f32 %v360, %v361
        %v363 = vrot.slane %v362, 1
        %v364 = vadd.f32 %v362, %v363
        %v365 = vrot.slane %v270, 4
        %v366 = vadd.f32 %v270, %v365
        %v367 = vrot.slane %v366, 2
        %v368 = vadd.f32 %v366, %v367
        %v369 = vrot.slane %v368, 1
        %v370 = vadd.f32 %v368, %v369
        %v371 = vrot.slane %v273, 4
        %v372 = vadd.f32 %v273, %v371
        %v373 = vrot.slane %v372, 2
        %v374 = vadd.f32 %v372, %v373
        %v375 = vrot.slane %v374, 1
        %v376 = vadd.f32 %v374, %v375
        %v377 = vrot.slane %v276, 4
        %v378 = vadd.f32 %v276, %v377
        %v379 = vrot.slane %v378, 2
        %v380 = vadd.f32 %v378, %v379
        %v381 = vrot.slane %v380, 1
        %v382 = vadd.f32 %v380, %v381
        %v383 = vrot.slane %v279, 4
        %v384 = vadd.f32 %v279, %v383
        %v385 = vrot.slane %v384, 2
        %v386 = vadd.f32 %v384, %v385
        %v387 = vrot.slane %v386, 1
        %v388 = vadd.f32 %v386, %v387
        %v389 = vrot.slane %v282, 4
        %v390 = vadd.f32 %v282, %v389
        %v391 = vrot.slane %v390, 2
        %v392 = vadd.f32 %v390, %v391
        %v393 = vrot.slane %v392, 1
        %v394 = vadd.f32 %v392, %v393
        %v396 = vrot.slane %v346, 1
        %v397 = vrot.slane %v346, 2
        %v398 = vrot.slane %v346, 3
        %v399 = vrot.slane %v346, 4
        %v400 = vrot.slane %v346, 5
        %v401 = vrot.slane %v346, 6
        %v402 = vrot.slane %v346, 7
        %v411 = vrcp.pop %v346
        %v412 = vmul.f32 %v346, %v411
        %v413 = vsub.f32 1.0, %v412
        %v414 = vmul.f32 %v411, %v413
        %v415 = vadd.f32 %v411, %v414
        %vm416 = vweird.f32 %v346
        %vm417 = vweird.f32 %v411
        %vm418 = vmor %vm416, %vm417
        %v419 = vsel %vm418, %v411, %v415
        %v420 = vand.u32 2147483647, %v346
        %vm421 = vcmp.eq.f32.partialorder %v420, 8.507059e+37
        %v422 = vand.u32 %v346, 2147483648
        %v423 = vor.u32 1.1754944e-38, %v422
        %v424 = vsel %vm421, %v423, %v419
        %v425 = vmul.f32 %v352, %v424
        %v426 = vrcp.pop %v396
        %v427 = vmul.f32 %v396, %v426
        %v428 = vsub.f32 1.0, %v427
        %v429 = vmul.f32 %v426, %v428
        %v430 = vadd.f32 %v426, %v429
        %vm431 = vweird.f32 %v396
        %vm432 = vweird.f32 %v426
        %vm433 = vmor %vm431, %vm432
        %v434 = vsel %vm433, %v426, %v430
        %v435 = vand.u32 2147483647, %v396
        %vm436 = vcmp.eq.f32.partialorder %v435, 8.507059e+37
        %v437 = vand.u32 %v396, 2147483648
        %v438 = vor.u32 1.1754944e-38, %v437
        %v439 = vsel %vm436, %v438, %v434
        %v440 = vmul.f32 %v358, %v439
        %v441 = vrcp.pop %v397
        %v442 = vmul.f32 %v397, %v441
        %v443 = vsub.f32 1.0, %v442
        %v444 = vmul.f32 %v441, %v443
        %v445 = vadd.f32 %v441, %v444
        %vm446 = vweird.f32 %v397
        %vm447 = vweird.f32 %v441
        %vm448 = vmor %vm446, %vm447
        %v449 = vsel %vm448, %v441, %v445
        %v450 = vand.u32 2147483647, %v397
        %vm451 = vcmp.eq.f32.partialorder %v450, 8.507059e+37
        %v452 = vand.u32 %v397, 2147483648
        %v453 = vor.u32 1.1754944e-38, %v452
        %v454 = vsel %vm451, %v453, %v449
        %v455 = vmul.f32 %v364, %v454
        %v456 = vrcp.pop %v398
        %v457 = vmul.f32 %v398, %v456
        %v458 = vsub.f32 1.0, %v457
        %v459 = vmul.f32 %v456, %v458
        %v460 = vadd.f32 %v456, %v459
        %vm461 = vweird.f32 %v398
        %vm462 = vweird.f32 %v456
        %vm463 = vmor %vm461, %vm462
        %v464 = vsel %vm463, %v456, %v460
        %v465 = vand.u32 2147483647, %v398
        %vm466 = vcmp.eq.f32.partialorder %v465, 8.507059e+37
        %v467 = vand.u32 %v398, 2147483648
        %v468 = vor.u32 1.1754944e-38, %v467
        %v469 = vsel %vm466, %v468, %v464
        %v470 = vmul.f32 %v370, %v469
        %v471 = vrcp.pop %v399
        %v472 = vmul.f32 %v399, %v471
        %v473 = vsub.f32 1.0, %v472
        %v474 = vmul.f32 %v471, %v473
        %v475 = vadd.f32 %v471, %v474
        %vm476 = vweird.f32 %v399
        %vm477 = vweird.f32 %v471
        %vm478 = vmor %vm476, %vm477
        %v479 = vsel %vm478, %v471, %v475
        %v480 = vand.u32 2147483647, %v399
        %vm481 = vcmp.eq.f32.partialorder %v480, 8.507059e+37
        %v482 = vand.u32 %v399, 2147483648
        %v483 = vor.u32 1.1754944e-38, %v482
        %v484 = vsel %vm481, %v483, %v479
        %v485 = vmul.f32 %v376, %v484
        %v486 = vrcp.pop %v400
        %v487 = vmul.f32 %v400, %v486
        %v488 = vsub.f32 1.0, %v487
        %v489 = vmul.f32 %v486, %v488
        %v490 = vadd.f32 %v486, %v489
        %vm491 = vweird.f32 %v400
        %vm492 = vweird.f32 %v486
        %vm493 = vmor %vm491, %vm492
        %v494 = vsel %vm493, %v486, %v490
        %v495 = vand.u32 2147483647, %v400
        %vm496 = vcmp.eq.f32.partialorder %v495, 8.507059e+37
        %v497 = vand.u32 %v400, 2147483648
        %v498 = vor.u32 1.1754944e-38, %v497
        %v499 = vsel %vm496, %v498, %v494
        %v500 = vmul.f32 %v382, %v499
        %v501 = vrcp.pop %v401
        %v502 = vmul.f32 %v401, %v501
        %v503 = vsub.f32 1.0, %v502
        %v504 = vmul.f32 %v501, %v503
        %v505 = vadd.f32 %v501, %v504
        %vm506 = vweird.f32 %v401
        %vm507 = vweird.f32 %v501
        %vm508 = vmor %vm506, %vm507
        %v509 = vsel %vm508, %v501, %v505
        %v510 = vand.u32 2147483647, %v401
        %vm511 = vcmp.eq.f32.partialorder %v510, 8.507059e+37
        %v512 = vand.u32 %v401, 2147483648
        %v513 = vor.u32 1.1754944e-38, %v512
        %v514 = vsel %vm511, %v513, %v509
        %v515 = vmul.f32 %v388, %v514
        %v516 = vrcp.pop %v402
        %v517 = vmul.f32 %v402, %v516
        %v518 = vsub.f32 1.0, %v517
        %v519 = vmul.f32 %v516, %v518
        %v520 = vadd.f32 %v516, %v519
        %vm521 = vweird.f32 %v402
        %vm522 = vweird.f32 %v516
        %vm523 = vmor %vm521, %vm522
        %v524 = vsel %vm523, %v516, %v520
        %v525 = vand.u32 2147483647, %v402
        %vm526 = vcmp.eq.f32.partialorder %v525, 8.507059e+37
        %v527 = vand.u32 %v402, 2147483648
        %v528 = vor.u32 1.1754944e-38, %v527
        %v529 = vsel %vm526, %v528, %v524
        %v530 = vmul.f32 %v394, %v529
        %v539 = vrot.slane %v440, 7
        %v540 = vsel %vm327, %v539, %v425
        %v541 = vrot.slane %v455, 6
        %v542 = vsel %vm329, %v541, %v540
        %v543 = vrot.slane %v470, 5
        %v544 = vsel %vm331, %v543, %v542
        %v545 = vrot.slane %v485, 4
        %v546 = vsel %vm333, %v545, %v544
        %v547 = vrot.slane %v500, 3
        %v548 = vsel %vm335, %v547, %v546
        %v549 = vrot.slane %v515, 2
        %v550 = vsel %vm337, %v549, %v548
        %v551 = vrot.slane %v530, 1
        %v552 = vsel %vm339, %v551, %v550
        %v553 = vsel %vm260, %v552, 0
        %555 = vmatpush.msra.mxu0 0.0
        %556 = vmatpush.msra.mxu0 0.0
        %557 = vmatpush.msra.mxu0 0.0
        %558 = vmatpush.msra.mxu0 0.0
        %559 = vmatpush.msra.mxu0 0.0
        %560 = vmatpush.msra.mxu0 0.0
        %561 = vmatpush.msra.mxu0 0.0
        %562 = vmatpush.msra.mxu0 0.0
        %563 = vmatpush.msra.mxu0 0.0
        %564 = vmatpush.msra.mxu0 0.0
        %565 = vmatpush.msra.mxu0 0.0
        %566 = vmatpush.msra.mxu0 0.0
        %567 = vmatpush.msra.mxu0 %v259
        %568 = vmatpush.msra.mxu0 %v258
        %569 = vmatpush.msra.mxu0 %v257
        %570 = vmatpush.msra.mxu0 %v256
        %571 = vmatmul.f32.gmra.mxu0 %v553
        %v572 = vpop.f32.mrf.mxu0
        %v573 = vadd.f32 0.0, %v572
        %574 = vdwg.mxu0
        %v575 = vmul.f32 %v247, 0.7
        %v576 = vmul.f32 %v573, 0.3
        %v577 = vadd.f32 %v575, %v576
        %578 = vst.msk [vmem:[%s245] sm:$0xff] %vm260, %v577
        %s579 = sand.u32 %s104, 1
        %s580 = scalar_lea.sflag [#allocation4], %s579
        %s581 = sand.u32 %s104, 1
        %s582 = smul.addr %s581, 8
        %s583 = scalar_lea.vmem [#allocation8], %s582
        // Predicated region
        $region45: #{tpu_custom_call.1} parent=31 // pred_check
          %p584 = pneg %p114
        $region46: #{tpu_custom_call.1} parent=31 // pred_check_branch
          %586 = sbr.rel (%p584) target = $region48
        $region47: #{tpu_custom_call.1} parent=31 // pred_region
          %588 = vsyncadd %s580, 0
          %s589 = smul.addr %s23, 8
          %s590 = scalar_lea.hbm %s3, %s589
          %s592 = sshll.u32 %s583, 4
          %s593 = int_to_ptr.vmem [resolvable:$true] %s592
          %s594 = sshll.u32 %s590, 4
          %s595 = int_to_ptr.hbm [resolvable:$true] %s594
          %597 = dma.vmem_to_hbm [thread:$0]  %s593, 128, %s595, %s580
        $region48: #{tpu_custom_call.1} parent=31 // pred_fallthru
          _
      $region32: #{tpu_custom_call.1} parent=5 // pred_fallthru
        _
      %p598 = scmp.le.s32.totalorder 2, %s18
      // Predicated region
      $region49: #{tpu_custom_call.1} parent=5 // pred_check
        %p599 = pneg %p598
      $region50: #{tpu_custom_call.1} parent=5 // pred_check_branch
        %601 = sbr.rel (%p599) target = $region52
      $region51: #{tpu_custom_call.1} parent=5 // pred_region
        %s602 = ssub.s32 %s18, 2
        // Predicated region
        $region53: #{tpu_custom_call.1} parent=51 // pred_check
          %p603 = pneg %p120
        $region54: #{tpu_custom_call.1} parent=51 // pred_check_branch
          %605 = sbr.rel (%p603) target = $region56
        $region55: #{tpu_custom_call.1} parent=51 // pred_region
          %s606 = sand.u32 %s105, 1
          %s607 = scalar_lea.sflag [#allocation4], %s606
          %s608 = sand.u32 %s105, 1
          %s609 = smul.addr %s608, 8
          %s610 = scalar_lea.vmem [#allocation8], %s609
          %612 = dma.done %s607, 128
        $region56: #{tpu_custom_call.1} parent=51 // pred_fallthru
          _
      $region52: #{tpu_custom_call.1} parent=5 // pred_fallthru
        _
    $region6: #{tpu_custom_call.1} parent=1 // loop_footer
      %s22 = sadd.s32 1, %s18
    $region7: #{tpu_custom_call.1} parent=1 // loop_footer_branch
      %17 = sbr.rel target = $region3
    $region8: #{tpu_custom_call.1} parent=1 // loop_exit
      _
    %613 = vsyncpa [#allocation3], 1
    %s614 = scalar_lea.sflag [#allocation3], 1
    %615 = vsyncpa %s614, 1
    %616 = vsyncpa [#allocation6], 1
    %s617 = scalar_lea.sflag [#allocation6], 1
    %618 = vsyncpa %s617, 1
    %619 = vsyncpa [#allocation4], 1
    %s620 = scalar_lea.sflag [#allocation4], 1
    %621 = vsyncpa %s620, 1

</llo_original>
